<compile_context>
chip_gen: v5e
topology: v5e:2x2
jax: 0.10.0
libtpu: 0.0.40
codegen_flags: <defaults>
</compile_context>

<pallas_src>
import jax
import jax.numpy as jnp
from jax import lax
from jax.experimental import pallas as pl
from jax.experimental.pallas import tpu as pltpu

_LANES = 128

# Path gating.
_ONEHOT_MAX_NUM_INST = 64      # keep the f32 one-hot matmul memory-bound on v5e too
_MIN_ROWS_FOR_PALLAS = 256     # below this, kernel launch overhead dominates
_MIN_CHANNELS_FOR_PALLAS = 8   # tiny rows -> plain XLA gather

# One-hot path tiling.
_VMEM_LIVE_BUDGET = 20 * 1024 * 1024   # live tile bytes (ids+out double-buffered + table)
_VMEM_LIMIT_BYTES = 32 * 1024 * 1024   # raises v5e's 16 MiB scoped default; <= v7x physical
_TILE_ROWS_WIDE_MAX = 2048             # wide rows per grid step, upper cap
_MIN_GRID_STEPS = 8                    # keep >= ~8 steps for pipelining / megacore balance

# Row-gather path.
_GATHER_ROWS_PER_STEP = 64             # rows DMA-gathered per grid step
_MAX_IDS_PER_CALL = 32768              # 1-D int32 SMEM prefetch pads to next_pow2(4N) bytes


def _round_up(x, n):
    return (x + n - 1) // n * n


# ----------------------------------------------------------------------------
# Path 1: small num_inst -> in-kernel one-hot gather on the MXU.
# ----------------------------------------------------------------------------
def _onehot_gather_kernel(ids_ref, table_ref, out_ref):
    """out[g, j*Cp:(j+1)*Cp] = table[ids[g, j], :]   for j in range(P).

    ids_ref:   (TG, P)    int32  -- P original rows packed per wide row
    table_ref: (N, Cp)    float  -- raw table, VMEM-resident (index_map -> (0,0))
    out_ref:   (TG, P*Cp) float  -- lane-dense output tile (P*Cp % 128 == 0)
    """
    tbl = table_ref[...]
    ids = ids_ref[...]
    tg, p = ids.shape
    n = tbl.shape[0]
    col = lax.broadcasted_iota(jnp.int32, (tg, n), 1)
    pieces = []
    for j in range(p):                               # static unroll, P <= 16
        one_hot = (col == ids[:, j:j + 1]).astype(tbl.dtype)
        pieces.append(jnp.dot(one_hot, tbl, preferred_element_type=jnp.float32))
    out_ref[...] = jnp.concatenate(pieces, axis=1).astype(out_ref.dtype)


def _onehot_gather(ids, table):
    """Gather via in-kernel one-hot @ raw table; ids already int32 in range."""
    m = ids.shape[0]
    num_inst, c = table.shape
    dtype = table.dtype

    # Lane-dense packing: pick Cp (>= C, zero-padded) and P such that
    # P * Cp is a multiple of 128 -> every output store is an unmasked vst.
    if c >= _LANES:
        cp_ = _round_up(c, _LANES)
        p = 1
    else:
        cp_ = pl.next_power_of_2(c)                  # 8 <= Cp <= 128, divides 128
        p = _LANES // cp_
    cw = p * cp_
    if cp_ != c:
        table = jnp.pad(table, ((0, 0), (0, cp_ - c)))

    rows_wide = -(-m // p)

    # VMEM budget: ids + output tiles are double-buffered; the ids block pads
    # its last dim to 128 lanes in VMEM; the raw table block is resident and
    # tiny (so default double-buffering of it costs only KiBs -> no Buffered(1)
    # needed now that the kron block-diagonal is gone).
    table_vmem = 2 * _round_up(num_inst, 8) * max(cp_, _LANES) * 4
    row_bytes = 2 * 4 * (_LANES + cw)
    tg_budget = max(8, (_VMEM_LIVE_BUDGET - table_vmem) // row_bytes)
    tg_steps = max(64, _round_up(-(-rows_wide // _MIN_GRID_STEPS), 8))
    tg = max(8, min(_TILE_ROWS_WIDE_MAX, tg_budget, tg_steps) // 8 * 8)

    num_tiles = -(-rows_wide // tg)
    rows_wide_pad = num_tiles * tg
    m_pad = rows_wide_pad * p

    # Only 4 B/row of ids travel to the kernel (vs. the old 4*P*num_inst B/row
    # keys_wide slab).  Padding uses id 0, which is a valid row; padded rows
    # are sliced off below.
    ids2d = jnp.pad(ids, (0, m_pad - m)).reshape(rows_wide_pad, p)

    cost = pl.CostEstimate(
        flops=2 * m_pad * num_inst * cp_,
        transcendentals=0,
        bytes_accessed=4 * (m_pad + num_inst * cp_ + m_pad * cp_),
    )

    out_wide = pl.pallas_call(
        _onehot_gather_kernel,
        out_shape=jax.ShapeDtypeStruct((rows_wide_pad, cw), dtype),
        grid=(num_tiles,),
        in_specs=[
            pl.BlockSpec((tg, p), lambda i: (i, 0)),
            pl.BlockSpec((num_inst, cp_), lambda i: (0, 0)),   # resident table
        ],
        out_specs=pl.BlockSpec((tg, cw), lambda i: (i, 0)),
        compiler_params=pltpu.CompilerParams(
            # independent tiles -> shards across v7x's two TensorCores
            dimension_semantics=("parallel",),
            vmem_limit_bytes=_VMEM_LIMIT_BYTES,
        ),
        cost_estimate=cost,
    )(ids2d, table)

    out = out_wide.reshape(m_pad, cp_)[:m]
    if cp_ != c:
        out = out[:, :c]
    return out


# ----------------------------------------------------------------------------
# Path 2: large num_inst -> scalar-prefetch ids + manual DMA row gather.
# ----------------------------------------------------------------------------
def _row_gather_kernel(ids_ref, table_hbm_ref, out_ref, copy_sems):
    """DMA-gather R table rows straight into the pipelined output block.

    ids_ref:       (chunk,) int32 in SMEM (scalar prefetch)
    table_hbm_ref: (num_inst, C) in HBM (memory_space=pl.ANY)
    out_ref:       (R, C) output block in VMEM -- DMA destination (no scratch copy)
    copy_sems:     (R,) DMA semaphores
    """
    step = pl.program_id(0)
    n_rows = out_ref.shape[0]
    copies = []
    for r in range(n_rows):                      # static unroll
        row = ids_ref[step * n_rows + r]
        cp = pltpu.make_async_copy(
            table_hbm_ref.at[row], out_ref.at[r], copy_sems.at[r])
        cp.start()
        copies.append(cp)
    for cp in copies:                            # all R gathers are in flight
        cp.wait()
    # Output double-buffering overlaps this step's HBM writeback with the next
    # step's gather DMAs, so no extra VMEM staging buffer is needed.


def _row_gather_chunk(ids_chunk, table):
    m_pad = ids_chunk.shape[0]                   # multiple of _GATHER_ROWS_PER_STEP
    num_inst, c = table.shape
    r_step = _GATHER_ROWS_PER_STEP

    cost = pl.CostEstimate(
        flops=0, transcendentals=0, bytes_accessed=4 * (m_pad + 2 * m_pad * c))

    grid_spec = pltpu.PrefetchScalarGridSpec(
        num_scalar_prefetch=1,
        grid=(m_pad // r_step,),
        in_specs=[pl.BlockSpec(memory_space=pl.ANY)],   # table stays in HBM
        out_specs=pl.BlockSpec((r_step, c), lambda i, ids_ref: (i, 0)),
        scratch_shapes=[pltpu.SemaphoreType.DMA((r_step,))],
    )
    return pl.pallas_call(
        _row_gather_kernel,
        out_shape=jax.ShapeDtypeStruct((m_pad, c), table.dtype),
        grid_spec=grid_spec,
        compiler_params=pltpu.CompilerParams(
            # disjoint output blocks -> megacore-shard the gather loop on v7x
            dimension_semantics=("parallel",)),
        cost_estimate=cost,
    )(ids_chunk, table)


def _row_gather(ids, table):
    """Row gather for large tables; ids already int32 in range."""
    m = ids.shape[0]
    r_step = _GATHER_ROWS_PER_STEP
    m_pad = _round_up(m, r_step)
    ids_pad = jnp.pad(ids, (0, m_pad - m))       # pad with id 0 (valid row)

    # Chunk so the scalar-prefetched id vector stays small in SMEM
    # (a 1-D int32 SMEM array pads to next_pow2(4*N) bytes).
    outs = []
    for start in range(0, m_pad, _MAX_IDS_PER_CALL):
        stop = min(start + _MAX_IDS_PER_CALL, m_pad)
        outs.append(_row_gather_chunk(ids_pad[start:stop], table))
    out = outs[0] if len(outs) == 1 else jnp.concatenate(outs, axis=0)
    return out[:m]


# ----------------------------------------------------------------------------
# Public forward: mirrors InstEmbedding.forward (eval mode, beta_prob = 0).
# ----------------------------------------------------------------------------
def inst_embedding_forward(inst_id, table, *, num_inst, inst_channels,
                           min_rows_for_pallas=_MIN_ROWS_FOR_PALLAS):
    """JAX/Pallas equivalent of InstEmbedding.forward.

    Args:
      inst_id: (M,) integer instance ids.
      table:   (num_inst, inst_channels) embedding weight (ignored if C == 0).
    Returns:
      (M, inst_channels) instance codes.
    """
    m = inst_id.shape[0]
    if inst_channels == 0:
        # torch: torch.zeros(inst_id.shape + (0,))
        return jnp.zeros((m, 0), dtype=jnp.float32)

    assert table.shape == (num_inst, inst_channels), (
        table.shape, num_inst, inst_channels)

    if num_inst == 1:
        # torch: self.mapping(torch.zeros_like(inst_id)) -> row-0 broadcast;
        # a kernel launch here would be pure overhead.
        return jnp.broadcast_to(table[0], (m, inst_channels))

    # TODO(synk): training-time randomize_instance (beta_prob > 0 code swapping)
    # is RNG glue outside this eval forward and is not implemented here.

    # torch.nn.Embedding would raise on out-of-range ids; we clamp instead.
    ids = jnp.clip(inst_id.astype(jnp.int32), 0, num_inst - 1)

    if m < min_rows_for_pallas or inst_channels < _MIN_CHANNELS_FOR_PALLAS:
        # At tiny M / tiny C any pallas_call is pure launch/DMA overhead.
        return jnp.take(table, ids, axis=0)

    if num_inst <= _ONEHOT_MAX_NUM_INST:
        return _onehot_gather(ids, table)
    return _row_gather(ids, table)


if __name__ == "__main__":
    key = jax.random.PRNGKey(0)
    k_w, k_id, k_w2, k_id2, k_w3, k_id3 = jax.random.split(key, 6)

    # ---- main path: packed in-kernel one-hot MXU gather (small num_inst) -----
    num_inst, inst_channels, M = 4, 32, 4096      # P = 4, 8 grid tiles
    table = jax.random.normal(k_w, (num_inst, inst_channels), dtype=jnp.float32)
    inst_id = jax.random.randint(k_id, (M,), 0, num_inst, dtype=jnp.int32)

    out = jax.block_until_ready(
        inst_embedding_forward(inst_id, table,
                               num_inst=num_inst, inst_channels=inst_channels))
    ref = jnp.take(table, inst_id, axis=0)
    assert out.shape == (M, inst_channels)
    assert jnp.allclose(out, ref, atol=1e-5, rtol=1e-5), "one-hot gather mismatch"

    # ---- non-power-of-two C (exercises the zero-pad + lane-dense path) -------
    num_inst3, c3, m3 = 5, 24, 512
    table3 = jax.random.normal(k_w3, (num_inst3, c3), dtype=jnp.float32)
    inst_id3 = jax.random.randint(k_id3, (m3,), 0, num_inst3, dtype=jnp.int32)
    out3 = jax.block_until_ready(
        inst_embedding_forward(inst_id3, table3,
                               num_inst=num_inst3, inst_channels=c3))
    assert jnp.allclose(out3, jnp.take(table3, inst_id3, axis=0)), \
        "padded-C one-hot gather mismatch"

    # ---- num_inst == 1 (always row 0, no kernel) ------------------------------
    table1 = table[:1]
    out1 = jax.block_until_ready(
        inst_embedding_forward(inst_id, table1,
                               num_inst=1, inst_channels=inst_channels))
    assert jnp.allclose(out1, jnp.broadcast_to(table1[0], (M, inst_channels)))

    # ---- inst_channels == 0 ---------------------------------------------------
    out0 = inst_embedding_forward(inst_id, None, num_inst=num_inst,
                                  inst_channels=0)
    assert out0.shape == (M, 0)

    # ---- large num_inst: scalar-prefetch + direct-to-output DMA gather -------
    num_inst2, c2, m2 = 256, 256, 512
    table2 = jax.random.normal(k_w2, (num_inst2, c2), dtype=jnp.float32)
    inst_id2 = jax.random.randint(k_id2, (m2,), 0, num_inst2, dtype=jnp.int32)
    out2 = jax.block_until_ready(
        inst_embedding_forward(inst_id2, table2,
                               num_inst=num_inst2, inst_channels=c2))
    assert jnp.allclose(out2, jnp.take(table2, inst_id2, axis=0)), \
        "row gather mismatch"

    # ---- tiny-M fallback (launch-overhead regime) -----------------------------
    out_small = jax.block_until_ready(
        inst_embedding_forward(inst_id[:8], table,
                               num_inst=num_inst, inst_channels=inst_channels))
    assert jnp.allclose(out_small, jnp.take(table, inst_id[:8], axis=0))

    print("KERNEL_OK")
</pallas_src>

<mosaic_0001>
module attributes {stable_mosaic.version = 11 : i64} {
  func.func @_onehot_gather_kernel(%arg0: i32, %arg1: memref<128x4xi32, #tpu.memory_space<vmem>>, %arg2: memref<4x32xf32, #tpu.memory_space<vmem>>, %arg3: memref<128x128xf32, #tpu.memory_space<vmem>>) attributes {dimension_semantics = [#tpu.dimension_semantics<parallel>], iteration_bounds = array<i64: 8>, scalar_prefetch = 0 : i64, scratch_operands = 0 : i64, tpu.core_type = #tpu.core_type<tc>, window_params = [{transform_indices = @transform_0, window_bounds = array<i64: 128, 4>}, {pipeline_mode = #tpu.pipeline_mode<synchronous>, transform_indices = @transform_1, window_bounds = array<i64: 4, 32>}, {transform_indices = @transform_2, window_bounds = array<i64: 128, 128>}]} {
    %c0 = arith.constant 0 : index
    %c0_0 = arith.constant 0 : index
    %0 = vector.load %arg2[%c0, %c0_0] : memref<4x32xf32, #tpu.memory_space<vmem>>, vector<4x32xf32>
    %c0_1 = arith.constant 0 : index
    %c0_2 = arith.constant 0 : index
    %1 = vector.load %arg1[%c0_1, %c0_2] : memref<128x4xi32, #tpu.memory_space<vmem>>, vector<128x4xi32>
    %2 = tpu.iota {dimensions = array<i32: 1>} : vector<128x4xi32>
    %3 = vector.extract_strided_slice %1 {offsets = [0, 0], sizes = [128, 1], strides = [1, 1]} : vector<128x4xi32> to vector<128x1xi32>
    %4 = vector.broadcast %3 : vector<128x1xi32> to vector<128x4xi32>
    %5 = arith.cmpi eq, %2, %4 : vector<128x4xi32>
    %6 = arith.extui %5 : vector<128x4xi1> to vector<128x4xi32>
    %7 = arith.sitofp %6 : vector<128x4xi32> to vector<128x4xf32>
    %cst = arith.constant dense<0.000000e+00> : vector<128x32xf32>
    %8 = tpu.matmul %7, %0, %cst {dimension_numbers = #tpu.dot_dimension_numbers<[1], [0], [0], [1], [0, 0, 1, 1], [], []>} : vector<128x4xf32>, vector<4x32xf32>, vector<128x32xf32> -> vector<128x32xf32>
    %9 = vector.extract_strided_slice %1 {offsets = [0, 1], sizes = [128, 1], strides = [1, 1]} : vector<128x4xi32> to vector<128x1xi32>
    %10 = vector.broadcast %9 : vector<128x1xi32> to vector<128x4xi32>
    %11 = arith.cmpi eq, %2, %10 : vector<128x4xi32>
    %12 = arith.extui %11 : vector<128x4xi1> to vector<128x4xi32>
    %13 = arith.sitofp %12 : vector<128x4xi32> to vector<128x4xf32>
    %cst_3 = arith.constant dense<0.000000e+00> : vector<128x32xf32>
    %14 = tpu.matmul %13, %0, %cst_3 {dimension_numbers = #tpu.dot_dimension_numbers<[1], [0], [0], [1], [0, 0, 1, 1], [], []>} : vector<128x4xf32>, vector<4x32xf32>, vector<128x32xf32> -> vector<128x32xf32>
    %15 = vector.extract_strided_slice %1 {offsets = [0, 2], sizes = [128, 1], strides = [1, 1]} : vector<128x4xi32> to vector<128x1xi32>
    %16 = vector.broadcast %15 : vector<128x1xi32> to vector<128x4xi32>
    %17 = arith.cmpi eq, %2, %16 : vector<128x4xi32>
    %18 = arith.extui %17 : vector<128x4xi1> to vector<128x4xi32>
    %19 = arith.sitofp %18 : vector<128x4xi32> to vector<128x4xf32>
    %cst_4 = arith.constant dense<0.000000e+00> : vector<128x32xf32>
    %20 = tpu.matmul %19, %0, %cst_4 {dimension_numbers = #tpu.dot_dimension_numbers<[1], [0], [0], [1], [0, 0, 1, 1], [], []>} : vector<128x4xf32>, vector<4x32xf32>, vector<128x32xf32> -> vector<128x32xf32>
    %21 = vector.extract_strided_slice %1 {offsets = [0, 3], sizes = [128, 1], strides = [1, 1]} : vector<128x4xi32> to vector<128x1xi32>
    %22 = vector.broadcast %21 : vector<128x1xi32> to vector<128x4xi32>
    %23 = arith.cmpi eq, %2, %22 : vector<128x4xi32>
    %24 = arith.extui %23 : vector<128x4xi1> to vector<128x4xi32>
    %25 = arith.sitofp %24 : vector<128x4xi32> to vector<128x4xf32>
    %cst_5 = arith.constant dense<0.000000e+00> : vector<128x32xf32>
    %26 = tpu.matmul %25, %0, %cst_5 {dimension_numbers = #tpu.dot_dimension_numbers<[1], [0], [0], [1], [0, 0, 1, 1], [], []>} : vector<128x4xf32>, vector<4x32xf32>, vector<128x32xf32> -> vector<128x32xf32>
    %27 = tpu.concatenate %8, %14, %20, %26 in 1 : vector<128x32xf32>, vector<128x32xf32>, vector<128x32xf32>, vector<128x32xf32> -> vector<128x128xf32>
    %c0_6 = arith.constant 0 : index
    %c0_7 = arith.constant 0 : index
    %28 = vector.load %arg3[%c0_6, %c0_7] : memref<128x128xf32, #tpu.memory_space<vmem>>, vector<128x128xf32>
    tpu.vector_store %arg3[%c0_6, %c0_7], %27 {strides = array<i32>} : memref<128x128xf32, #tpu.memory_space<vmem>>, vector<128x128xf32>,
    return
  }
  func.func @transform_0(%arg0: i32) -> (i32, i32) {
    %c0_i32 = arith.constant 0 : i32
    %c0_i32_0 = arith.constant 0 : i32
    return %arg0, %c0_i32 : i32, i32
  }
  func.func @transform_1(%arg0: i32) -> (i32, i32) {
    %c0_i32 = arith.constant 0 : i32
    %c0_i32_0 = arith.constant 0 : i32
    %c0_i32_1 = arith.constant 0 : i32
    return %c0_i32, %c0_i32_0 : i32, i32
  }
  func.func @transform_2(%arg0: i32) -> (i32, i32) {
    %c0_i32 = arith.constant 0 : i32
    %c0_i32_0 = arith.constant 0 : i32
    return %arg0, %c0_i32 : i32, i32
  }
}

</mosaic_0001>

<llo_original>
// kernel: tpu_custom_call.1
$region0: #{tpu_custom_call.1}
  #allocation0 [shape = 'u32[]', space=smem, size = 0x4, offset = 0x4, fixed_abs, tag = 'smem constant byte address 0x4 - core index']
  #allocation1 [shape = 'u32[72,128]{1,0:T(1,128)}', space=vmem, size = 0x9000, scoped, tag = 'internal scratch']
  %s0 = inlined_call_operand.vmem [shape: s32[1024,4], index: 0, kind: input, shape index: {}]
  %s1 = inlined_call_operand.vmem [shape: f32[4,32], index: 1, kind: input, shape index: {}]
  %s2 = inlined_call_operand.hbm [shape: f32[1024,128], index: 2, kind: output, shape index: {}]
  %s3 = sld [smem:[#allocation0]]
  $region41: #{tpu_custom_call.1} parent=0
    _
  %s5 = ssub.s32 1, %s3
  %s6 = scalar_select 0, %s5, %s3
  $region1: #{tpu_custom_call.1} parent=0
    #allocation2 [shape = 'u8[131072]{0}', space=vmem, size = 0x20000, scoped, tag = 'output window, operand 0']
    #allocation3 [shape = 's32[2]{0}', space=sflag, size = 0x8, scoped, tag = 'scoped memory for tpu_custom_call.1']
    %7 = vsyncpa [#allocation3], 0
    %s8 = scalar_lea.sflag [#allocation3], 1
    %9 = vsyncpa %s8, 0
    loop: start=0, step=1, limit=10
    $region2: #{tpu_custom_call.1} parent=1 // loop_pre_header
      _
    $region3: #{tpu_custom_call.1} parent=1 // loop_header
      %s11 = sphi 0, %s15
      %p12 = scmp.ge.s32.totalorder %s11, 10
      %s21 = sphi 0, %s23
      %s24 = sphi 0, %s21
      %s25 = sphi 0, %s24
      %s41 = sphi 0, %s25
      %s45 = sphi 0, %s45
      %s47 = sphi 0, %s45
      %s48 = sphi 0, %s47
      %s62 = sphi 0, %s48
      %s68 = sphi 0, %s70
      %s71 = sphi 0, %s68
      %s72 = sphi 0, %s71
      %s88 = sphi 0, %s72
    $region4: #{tpu_custom_call.1} parent=1 // loop_header_branch
      %14 = sbr.rel (%p12) target = $region8
    $region5: #{tpu_custom_call.1} parent=1 // loop_body
      %s16 = ssub.s32 %s11, 1
      %s17 = ssub.s32 %s11, 2
      %s18 = sadd.s32 %s11, 1
      %s19 = ssub.s32 %s11, %s18
      %p20 = scmp.eq.s32.totalorder %s19, 0
      %s22 = sadd.s32 %s21, 1
      %s23 = scalar_select %p20, %s21, %s22
      %p26 = pneg %p20
      %p27 = scmp.eq.s32.totalorder %s11, 7
      %p28 = por %p26, %p27
      %p29 = scmp.ne.s32.totalorder %s21, %s24
      %p30 = scmp.eq.s32.totalorder %s11, 0
      %p31 = por %p29, %p30
      %p32 = scmp.ne.s32.totalorder %s21, %s24
      %p33 = scmp.eq.s32.totalorder %s16, 7
      %p34 = por %p32, %p33
      %p35 = scmp.ne.s32.totalorder %s24, %s25
      %p36 = scmp.eq.s32.totalorder %s16, 0
      %p37 = por %p35, %p36
      %p38 = scmp.ne.s32.totalorder %s24, %s25
      %p39 = scmp.eq.s32.totalorder %s17, 7
      %p40 = por %p38, %p39
      %p42 = scmp.ne.s32.totalorder %s25, %s41
      %p43 = scmp.eq.s32.totalorder %s17, 0
      %p44 = por %p42, %p43
      %s46 = sadd.s32 %s45, 1
      %p49 = scmp.eq.s32.totalorder %s11, 7
      %p50 = scmp.ne.s32.totalorder %s45, %s47
      %p51 = scmp.eq.s32.totalorder %s11, 0
      %p52 = por %p50, %p51
      %p53 = scmp.ne.s32.totalorder %s45, %s47
      %p54 = scmp.eq.s32.totalorder %s16, 7
      %p55 = por %p53, %p54
      %p56 = scmp.ne.s32.totalorder %s47, %s48
      %p57 = scmp.eq.s32.totalorder %s16, 0
      %p58 = por %p56, %p57
      %p59 = scmp.ne.s32.totalorder %s47, %s48
      %p60 = scmp.eq.s32.totalorder %s17, 7
      %p61 = por %p59, %p60
      %p63 = scmp.ne.s32.totalorder %s48, %s62
      %p64 = scmp.eq.s32.totalorder %s17, 0
      %p65 = por %p63, %p64
      %s66 = ssub.s32 %s11, %s18
      %p67 = scmp.eq.s32.totalorder %s66, 0
      %s69 = sadd.s32 %s68, 1
      %s70 = scalar_select %p67, %s68, %s69
      %p73 = pneg %p67
      %p74 = scmp.eq.s32.totalorder %s11, 7
      %p75 = por %p73, %p74
      %p76 = scmp.ne.s32.totalorder %s68, %s71
      %p77 = scmp.eq.s32.totalorder %s11, 0
      %p78 = por %p76, %p77
      %p79 = scmp.ne.s32.totalorder %s68, %s71
      %p80 = scmp.eq.s32.totalorder %s16, 7
      %p81 = por %p79, %p80
      %p82 = scmp.ne.s32.totalorder %s71, %s72
      %p83 = scmp.eq.s32.totalorder %s16, 0
      %p84 = por %p82, %p83
      %p85 = scmp.ne.s32.totalorder %s71, %s72
      %p86 = scmp.eq.s32.totalorder %s17, 7
      %p87 = por %p85, %p86
      %p89 = scmp.ne.s32.totalorder %s72, %s88
      %p90 = scmp.eq.s32.totalorder %s17, 0
      %p91 = por %p89, %p90
      %p92 = scmp.le.s32.totalorder 1, %s11
      %p93 = scmp.lt.s32.totalorder %s11, 9
      %p94 = pnand %p92, %p93
      %p95 = pneg %p94
      // Predicated region
      $region9: #{tpu_custom_call.1} parent=5 // pred_check
        _
      $region10: #{tpu_custom_call.1} parent=5 // pred_check_branch
        %97 = sbr.rel (%p94) target = $region12
      $region11: #{tpu_custom_call.1} parent=5 // pred_region
        %s98 = ssub.s32 %s11, 1
        // Predicated region
        $region13: #{tpu_custom_call.1} parent=11 // pred_check
          %p99 = pneg %p58
        $region14: #{tpu_custom_call.1} parent=11 // pred_check_branch
          %101 = sbr.rel (%p99) target = $region16
        $region15: #{tpu_custom_call.1} parent=11 // pred_region
          _
        $region16: #{tpu_custom_call.1} parent=11 // pred_fallthru
          _
      $region12: #{tpu_custom_call.1} parent=5 // pred_fallthru
        _
      %p102 = scmp.lt.s32.totalorder %s11, 8
      // Predicated region
      $region17: #{tpu_custom_call.1} parent=5 // pred_check
        %p103 = pneg %p102
      $region18: #{tpu_custom_call.1} parent=5 // pred_check_branch
        %105 = sbr.rel (%p103) target = $region20
      $region19: #{tpu_custom_call.1} parent=5 // pred_region
        // Predicated region
        $region21: #{tpu_custom_call.1} parent=19 // pred_check
          %p106 = pneg %p31
        $region22: #{tpu_custom_call.1} parent=19 // pred_check_branch
          %108 = sbr.rel (%p106) target = $region24
        $region23: #{tpu_custom_call.1} parent=19 // pred_region
          %s109 = smul.u32 16, %s11
          %p110 = scmp.lt.s32.totalorder %s109, 127
          %s111 = scalar_select %p110, %s109, 127
          %s112 = smul.addr %s111, 8
          %s113 = scalar_lea.vmem %s0, %s112
          %s114 = smul.u32 16, %s11
        $region24: #{tpu_custom_call.1} parent=19 // pred_fallthru
          _
      $region20: #{tpu_custom_call.1} parent=5 // pred_fallthru
        _
      %p115 = scmp.le.s32.totalorder 1, %s11
      %p116 = scmp.lt.s32.totalorder %s11, 9
      %p117 = pnand %p115, %p116
      %p118 = pneg %p117
      // Predicated region
      $region25: #{tpu_custom_call.1} parent=5 // pred_check
        _
      $region26: #{tpu_custom_call.1} parent=5 // pred_check_branch
        %120 = sbr.rel (%p117) target = $region28
      $region27: #{tpu_custom_call.1} parent=5 // pred_region
        %s121 = ssub.s32 %s11, 1
        %s122 = smul.u32 16, %s16
        %p123 = scmp.lt.s32.totalorder %s122, 127
        %s124 = scalar_select %p123, %s122, 127
        %s125 = smul.addr %s124, 8
        %s126 = scalar_lea.vmem %s0, %s125
        %p127 = pneg %p37
        %p128 = pneg %p34
        %p129 = pneg %p58
        %p130 = pneg %p55
        %p131 = pneg %p84
        %p132 = pneg %p81
        %s133 = sand.u32 %s71, 1
        %s134 = scalar_lea.sflag [#allocation3], %s133
        %s135 = sand.u32 %s71, 1
        %s136 = smul.addr %s135, 128
        %s137 = scalar_lea.vmem [#allocation2], %s136
        %s138 = smul.u32 16, %s16
        %p139 = scmp.lt.s32.totalorder %s138, 127
        %s140 = scalar_select %p139, %s138, 127
        %s141 = smul.addr %s140, 8
        %s142 = scalar_lea.vmem %s0, %s141
        %s143 = smul.u32 16, %s16
        %s144 = smul.u32 16, %s16
        %v145 = vld [vmem:[%s1] sm:$0xf]
        %v146 = vld [vmem:[%s142] sm:$0xff]
        %v147 = vld [vmem:[%s142 + $0x8] sm:$0xff]
        %v148 = vld [vmem:[%s142 + $0x10] sm:$0xff]
        %v149 = vld [vmem:[%s142 + $0x18] sm:$0xff]
        %v150 = vld [vmem:[%s142 + $0x20] sm:$0xff]
        %v151 = vld [vmem:[%s142 + $0x28] sm:$0xff]
        %v152 = vld [vmem:[%s142 + $0x30] sm:$0xff]
        %v153 = vld [vmem:[%s142 + $0x38] sm:$0xff]
        %v154 = vld [vmem:[%s142 + $0x40] sm:$0xff]
        %v155 = vld [vmem:[%s142 + $0x48] sm:$0xff]
        %v156 = vld [vmem:[%s142 + $0x50] sm:$0xff]
        %v157 = vld [vmem:[%s142 + $0x58] sm:$0xff]
        %v158 = vld [vmem:[%s142 + $0x60] sm:$0xff]
        %v159 = vld [vmem:[%s142 + $0x68] sm:$0xff]
        %v160 = vld [vmem:[%s142 + $0x70] sm:$0xff]
        %v161 = vld [vmem:[%s142 + $0x78] sm:$0xff]
        %v162 = vlaneseq
        %v163 = vand.u32 %v162, 127
        %164 = vset.pattern.permute.xlu0 0
        %165 = vperm.xlu0 %164, %v146
        %v166 = vpop.permute.xlu0 %165
        %167 = vset.pattern.permute.xlu0 0
        %168 = vperm.xlu0 %167, %v147
        %v169 = vpop.permute.xlu0 %168
        %170 = vset.pattern.permute.xlu0 0
        %171 = vperm.xlu0 %170, %v148
        %v172 = vpop.permute.xlu0 %171
        %173 = vset.pattern.permute.xlu0 0
        %174 = vperm.xlu0 %173, %v149
        %v175 = vpop.permute.xlu0 %174
        %176 = vset.pattern.permute.xlu0 0
        %177 = vperm.xlu0 %176, %v150
        %v178 = vpop.permute.xlu0 %177
        %179 = vset.pattern.permute.xlu0 0
        %180 = vperm.xlu0 %179, %v151
        %v181 = vpop.permute.xlu0 %180
        %182 = vset.pattern.permute.xlu0 0
        %183 = vperm.xlu0 %182, %v152
        %v184 = vpop.permute.xlu0 %183
        %185 = vset.pattern.permute.xlu0 0
        %186 = vperm.xlu0 %185, %v153
        %v187 = vpop.permute.xlu0 %186
        %188 = vset.pattern.permute.xlu0 0
        %189 = vperm.xlu0 %188, %v154
        %v190 = vpop.permute.xlu0 %189
        %191 = vset.pattern.permute.xlu0 0
        %192 = vperm.xlu0 %191, %v155
        %v193 = vpop.permute.xlu0 %192
        %194 = vset.pattern.permute.xlu0 0
        %195 = vperm.xlu0 %194, %v156
        %v196 = vpop.permute.xlu0 %195
        %197 = vset.pattern.permute.xlu0 0
        %198 = vperm.xlu0 %197, %v157
        %v199 = vpop.permute.xlu0 %198
        %200 = vset.pattern.permute.xlu0 0
        %201 = vperm.xlu0 %200, %v158
        %v202 = vpop.permute.xlu0 %201
        %203 = vset.pattern.permute.xlu0 0
        %204 = vperm.xlu0 %203, %v159
        %v205 = vpop.permute.xlu0 %204
        %206 = vset.pattern.permute.xlu0 0
        %207 = vperm.xlu0 %206, %v160
        %v208 = vpop.permute.xlu0 %207
        %209 = vset.pattern.permute.xlu0 0
        %210 = vperm.xlu0 %209, %v161
        %v211 = vpop.permute.xlu0 %210
        %vm212 = vcmp.eq.s32.totalorder %v163, %v166
        %vm213 = vcmp.eq.s32.totalorder %v163, %v169
        %vm214 = vcmp.eq.s32.totalorder %v163, %v172
        %vm215 = vcmp.eq.s32.totalorder %v163, %v175
        %vm216 = vcmp.eq.s32.totalorder %v163, %v178
        %vm217 = vcmp.eq.s32.totalorder %v163, %v181
        %vm218 = vcmp.eq.s32.totalorder %v163, %v184
        %vm219 = vcmp.eq.s32.totalorder %v163, %v187
        %vm220 = vcmp.eq.s32.totalorder %v163, %v190
        %vm221 = vcmp.eq.s32.totalorder %v163, %v193
        %vm222 = vcmp.eq.s32.totalorder %v163, %v196
        %vm223 = vcmp.eq.s32.totalorder %v163, %v199
        %vm224 = vcmp.eq.s32.totalorder %v163, %v202
        %vm225 = vcmp.eq.s32.totalorder %v163, %v205
        %vm226 = vcmp.eq.s32.totalorder %v163, %v208
        %vm227 = vcmp.eq.s32.totalorder %v163, %v211
        %v228 = vsel %vm212, 1, 0
        %v229 = vsel %vm213, 1, 0
        %v230 = vsel %vm214, 1, 0
        %v231 = vsel %vm215, 1, 0
        %v232 = vsel %vm216, 1, 0
        %v233 = vsel %vm217, 1, 0
        %v234 = vsel %vm218, 1, 0
        %v235 = vsel %vm219, 1, 0
        %v236 = vsel %vm220, 1, 0
        %v237 = vsel %vm221, 1, 0
        %v238 = vsel %vm222, 1, 0
        %v239 = vsel %vm223, 1, 0
        %v240 = vsel %vm224, 1, 0
        %v241 = vsel %vm225, 1, 0
        %v242 = vsel %vm226, 1, 0
        %v243 = vsel %vm227, 1, 0
        %v244 = vcvt.s32.f32 %v228
        %v245 = vcvt.s32.f32 %v229
        %v246 = vcvt.s32.f32 %v230
        %v247 = vcvt.s32.f32 %v231
        %v248 = vcvt.s32.f32 %v232
        %v249 = vcvt.s32.f32 %v233
        %v250 = vcvt.s32.f32 %v234
        %v251 = vcvt.s32.f32 %v235
        %v252 = vcvt.s32.f32 %v236
        %v253 = vcvt.s32.f32 %v237
        %v254 = vcvt.s32.f32 %v238
        %v255 = vcvt.s32.f32 %v239
        %v256 = vcvt.s32.f32 %v240
        %v257 = vcvt.s32.f32 %v241
        %v258 = vcvt.s32.f32 %v242
        %v259 = vcvt.s32.f32 %v243
        %vm260 = vcmask 31744
        %v262 = vsel %vm260, %v244, 0
        %v265 = vsel %vm260, %v245, 0
        %v268 = vsel %vm260, %v246, 0
        %v271 = vsel %vm260, %v247, 0
        %v274 = vsel %vm260, %v248, 0
        %v277 = vsel %vm260, %v249, 0
        %v280 = vsel %vm260, %v250, 0
        %v283 = vsel %vm260, %v251, 0
        %v286 = vsel %vm260, %v252, 0
        %v289 = vsel %vm260, %v253, 0
        %v292 = vsel %vm260, %v254, 0
        %v295 = vsel %vm260, %v255, 0
        %v298 = vsel %vm260, %v256, 0
        %v301 = vsel %vm260, %v257, 0
        %v304 = vsel %vm260, %v258, 0
        %v307 = vsel %vm260, %v259, 0
        %vm309 = vcmask 1043456
        %v311 = vsel %vm309, %v145, 0
        %313 = vmatpush.msra.mxu0 0.0
        %314 = vmatpush.msra.mxu0 0.0
        %315 = vmatpush.msra.mxu0 0.0
        %316 = vmatpush.msra.mxu0 0.0
        %317 = vmatpush.msra.mxu0 0.0
        %318 = vmatpush.msra.mxu0 0.0
        %319 = vmatpush.msra.mxu0 0.0
        %320 = vmatpush.msra.mxu0 0.0
        %321 = vmatpush.msra.mxu0 0.0
        %322 = vmatpush.msra.mxu0 0.0
        %323 = vmatpush.msra.mxu0 0.0
        %324 = vmatpush.msra.mxu0 0.0
        %325 = vmatpush.msra.mxu0 0.0
        %326 = vmatpush.msra.mxu0 0.0
        %327 = vmatpush.msra.mxu0 0.0
        %328 = vmatpush.msra.mxu0 %v311
        %329 = vmatmul.f32.gmra.mxu0 %v262
        %v330 = vpop.f32.mrf.mxu0
        %v331 = vadd.f32 0.0, %v330
        %332 = vmatmul.f32.gmra.mxu0 %v265
        %v333 = vpop.f32.mrf.mxu0
        %v334 = vadd.f32 0.0, %v333
        %335 = vmatmul.f32.gmra.mxu0 %v268
        %v336 = vpop.f32.mrf.mxu0
        %v337 = vadd.f32 0.0, %v336
        %338 = vmatmul.f32.gmra.mxu0 %v271
        %v339 = vpop.f32.mrf.mxu0
        %v340 = vadd.f32 0.0, %v339
        %341 = vmatmul.f32.gmra.mxu0 %v274
        %v342 = vpop.f32.mrf.mxu0
        %v343 = vadd.f32 0.0, %v342
        %344 = vmatmul.f32.gmra.mxu0 %v277
        %v345 = vpop.f32.mrf.mxu0
        %v346 = vadd.f32 0.0, %v345
        %347 = vmatmul.f32.gmra.mxu0 %v280
        %v348 = vpop.f32.mrf.mxu0
        %v349 = vadd.f32 0.0, %v348
        %350 = vmatmul.f32.gmra.mxu0 %v283
        %v351 = vpop.f32.mrf.mxu0
        %v352 = vadd.f32 0.0, %v351
        %353 = vmatmul.f32.gmra.mxu0 %v286
        %v354 = vpop.f32.mrf.mxu0
        %v355 = vadd.f32 0.0, %v354
        %356 = vmatmul.f32.gmra.mxu0 %v289
        %v357 = vpop.f32.mrf.mxu0
        %v358 = vadd.f32 0.0, %v357
        %359 = vmatmul.f32.gmra.mxu0 %v292
        %v360 = vpop.f32.mrf.mxu0
        %v361 = vadd.f32 0.0, %v360
        %362 = vmatmul.f32.gmra.mxu0 %v295
        %v363 = vpop.f32.mrf.mxu0
        %v364 = vadd.f32 0.0, %v363
        %365 = vmatmul.f32.gmra.mxu0 %v298
        %v366 = vpop.f32.mrf.mxu0
        %v367 = vadd.f32 0.0, %v366
        %368 = vmatmul.f32.gmra.mxu0 %v301
        %v369 = vpop.f32.mrf.mxu0
        %v370 = vadd.f32 0.0, %v369
        %371 = vmatmul.f32.gmra.mxu0 %v304
        %v372 = vpop.f32.mrf.mxu0
        %v373 = vadd.f32 0.0, %v372
        %374 = vmatmul.f32.gmra.mxu0 %v307
        %v375 = vpop.f32.mrf.mxu0
        %v376 = vadd.f32 0.0, %v375
        %377 = vdwg.mxu0
        %378 = vset.pattern.permute.xlu0 1
        %379 = vperm.xlu0 %378, %v146
        %v380 = vpop.permute.xlu0 %379
        %381 = vset.pattern.permute.xlu0 1
        %382 = vperm.xlu0 %381, %v147
        %v383 = vpop.permute.xlu0 %382
        %384 = vset.pattern.permute.xlu0 1
        %385 = vperm.xlu0 %384, %v148
        %v386 = vpop.permute.xlu0 %385
        %387 = vset.pattern.permute.xlu0 1
        %388 = vperm.xlu0 %387, %v149
        %v389 = vpop.permute.xlu0 %388
        %390 = vset.pattern.permute.xlu0 1
        %391 = vperm.xlu0 %390, %v150
        %v392 = vpop.permute.xlu0 %391
        %393 = vset.pattern.permute.xlu0 1
        %394 = vperm.xlu0 %393, %v151
        %v395 = vpop.permute.xlu0 %394
        %396 = vset.pattern.permute.xlu0 1
        %397 = vperm.xlu0 %396, %v152
        %v398 = vpop.permute.xlu0 %397
        %399 = vset.pattern.permute.xlu0 1
        %400 = vperm.xlu0 %399, %v153
        %v401 = vpop.permute.xlu0 %400
        %402 = vset.pattern.permute.xlu0 1
        %403 = vperm.xlu0 %402, %v154
        %v404 = vpop.permute.xlu0 %403
        %405 = vset.pattern.permute.xlu0 1
        %406 = vperm.xlu0 %405, %v155
        %v407 = vpop.permute.xlu0 %406
        %408 = vset.pattern.permute.xlu0 1
        %409 = vperm.xlu0 %408, %v156
        %v410 = vpop.permute.xlu0 %409
        %411 = vset.pattern.permute.xlu0 1
        %412 = vperm.xlu0 %411, %v157
        %v413 = vpop.permute.xlu0 %412
        %414 = vset.pattern.permute.xlu0 1
        %415 = vperm.xlu0 %414, %v158
        %v416 = vpop.permute.xlu0 %415
        %417 = vset.pattern.permute.xlu0 1
        %418 = vperm.xlu0 %417, %v159
        %v419 = vpop.permute.xlu0 %418
        %420 = vset.pattern.permute.xlu0 1
        %421 = vperm.xlu0 %420, %v160
        %v422 = vpop.permute.xlu0 %421
        %423 = vset.pattern.permute.xlu0 1
        %424 = vperm.xlu0 %423, %v161
        %v425 = vpop.permute.xlu0 %424
        %vm426 = vcmp.eq.s32.totalorder %v163, %v380
        %vm427 = vcmp.eq.s32.totalorder %v163, %v383
        %vm428 = vcmp.eq.s32.totalorder %v163, %v386
        %vm429 = vcmp.eq.s32.totalorder %v163, %v389
        %vm430 = vcmp.eq.s32.totalorder %v163, %v392
        %vm431 = vcmp.eq.s32.totalorder %v163, %v395
        %vm432 = vcmp.eq.s32.totalorder %v163, %v398
        %vm433 = vcmp.eq.s32.totalorder %v163, %v401
        %vm434 = vcmp.eq.s32.totalorder %v163, %v404
        %vm435 = vcmp.eq.s32.totalorder %v163, %v407
        %vm436 = vcmp.eq.s32.totalorder %v163, %v410
        %vm437 = vcmp.eq.s32.totalorder %v163, %v413
        %vm438 = vcmp.eq.s32.totalorder %v163, %v416
        %vm439 = vcmp.eq.s32.totalorder %v163, %v419
        %vm440 = vcmp.eq.s32.totalorder %v163, %v422
        %vm441 = vcmp.eq.s32.totalorder %v163, %v425
        %v442 = vsel %vm426, 1, 0
        %v443 = vsel %vm427, 1, 0
        %v444 = vsel %vm428, 1, 0
        %v445 = vsel %vm429, 1, 0
        %v446 = vsel %vm430, 1, 0
        %v447 = vsel %vm431, 1, 0
        %v448 = vsel %vm432, 1, 0
        %v449 = vsel %vm433, 1, 0
        %v450 = vsel %vm434, 1, 0
        %v451 = vsel %vm435, 1, 0
        %v452 = vsel %vm436, 1, 0
        %v453 = vsel %vm437, 1, 0
        %v454 = vsel %vm438, 1, 0
        %v455 = vsel %vm439, 1, 0
        %v456 = vsel %vm440, 1, 0
        %v457 = vsel %vm441, 1, 0
        %v458 = vcvt.s32.f32 %v442
        %v459 = vcvt.s32.f32 %v443
        %v460 = vcvt.s32.f32 %v444
        %v461 = vcvt.s32.f32 %v445
        %v462 = vcvt.s32.f32 %v446
        %v463 = vcvt.s32.f32 %v447
        %v464 = vcvt.s32.f32 %v448
        %v465 = vcvt.s32.f32 %v449
        %v466 = vcvt.s32.f32 %v450
        %v467 = vcvt.s32.f32 %v451
        %v468 = vcvt.s32.f32 %v452
        %v469 = vcvt.s32.f32 %v453
        %v470 = vcvt.s32.f32 %v454
        %v471 = vcvt.s32.f32 %v455
        %v472 = vcvt.s32.f32 %v456
        %v473 = vcvt.s32.f32 %v457
        %v475 = vsel %vm260, %v458, 0
        %v478 = vsel %vm260, %v459, 0
        %v481 = vsel %vm260, %v460, 0
        %v484 = vsel %vm260, %v461, 0
        %v487 = vsel %vm260, %v462, 0
        %v490 = vsel %vm260, %v463, 0
        %v493 = vsel %vm260, %v464, 0
        %v496 = vsel %vm260, %v465, 0
        %v499 = vsel %vm260, %v466, 0
        %v502 = vsel %vm260, %v467, 0
        %v505 = vsel %vm260, %v468, 0
        %v508 = vsel %vm260, %v469, 0
        %v511 = vsel %vm260, %v470, 0
        %v514 = vsel %vm260, %v471, 0
        %v517 = vsel %vm260, %v472, 0
        %v520 = vsel %vm260, %v473, 0
        %522 = vmatpush.msra.mxu0 0.0
        %523 = vmatpush.msra.mxu0 0.0
        %524 = vmatpush.msra.mxu0 0.0
        %525 = vmatpush.msra.mxu0 0.0
        %526 = vmatpush.msra.mxu0 0.0
        %527 = vmatpush.msra.mxu0 0.0
        %528 = vmatpush.msra.mxu0 0.0
        %529 = vmatpush.msra.mxu0 0.0
        %530 = vmatpush.msra.mxu0 0.0
        %531 = vmatpush.msra.mxu0 0.0
        %532 = vmatpush.msra.mxu0 0.0
        %533 = vmatpush.msra.mxu0 0.0
        %534 = vmatpush.msra.mxu0 0.0
        %535 = vmatpush.msra.mxu0 0.0
        %536 = vmatpush.msra.mxu0 0.0
        %537 = vmatpush.msra.mxu0 %v311
        %538 = vmatmul.f32.gmra.mxu0 %v475
        %v539 = vpop.f32.mrf.mxu0
        %v540 = vadd.f32 0.0, %v539
        %541 = vmatmul.f32.gmra.mxu0 %v478
        %v542 = vpop.f32.mrf.mxu0
        %v543 = vadd.f32 0.0, %v542
        %544 = vmatmul.f32.gmra.mxu0 %v481
        %v545 = vpop.f32.mrf.mxu0
        %v546 = vadd.f32 0.0, %v545
        %547 = vmatmul.f32.gmra.mxu0 %v484
        %v548 = vpop.f32.mrf.mxu0
        %v549 = vadd.f32 0.0, %v548
        %550 = vmatmul.f32.gmra.mxu0 %v487
        %v551 = vpop.f32.mrf.mxu0
        %v552 = vadd.f32 0.0, %v551
        %553 = vmatmul.f32.gmra.mxu0 %v490
        %v554 = vpop.f32.mrf.mxu0
        %v555 = vadd.f32 0.0, %v554
        %556 = vmatmul.f32.gmra.mxu0 %v493
        %v557 = vpop.f32.mrf.mxu0
        %v558 = vadd.f32 0.0, %v557
        %559 = vmatmul.f32.gmra.mxu0 %v496
        %v560 = vpop.f32.mrf.mxu0
        %v561 = vadd.f32 0.0, %v560
        %562 = vmatmul.f32.gmra.mxu0 %v499
        %v563 = vpop.f32.mrf.mxu0
        %v564 = vadd.f32 0.0, %v563
        %565 = vmatmul.f32.gmra.mxu0 %v502
        %v566 = vpop.f32.mrf.mxu0
        %v567 = vadd.f32 0.0, %v566
        %568 = vmatmul.f32.gmra.mxu0 %v505
        %v569 = vpop.f32.mrf.mxu0
        %v570 = vadd.f32 0.0, %v569
        %571 = vmatmul.f32.gmra.mxu0 %v508
        %v572 = vpop.f32.mrf.mxu0
        %v573 = vadd.f32 0.0, %v572
        %574 = vmatmul.f32.gmra.mxu0 %v511
        %v575 = vpop.f32.mrf.mxu0
        %v576 = vadd.f32 0.0, %v575
        %577 = vmatmul.f32.gmra.mxu0 %v514
        %v578 = vpop.f32.mrf.mxu0
        %v579 = vadd.f32 0.0, %v578
        %580 = vmatmul.f32.gmra.mxu0 %v517
        %v581 = vpop.f32.mrf.mxu0
        %v582 = vadd.f32 0.0, %v581
        %583 = vmatmul.f32.gmra.mxu0 %v520
        %v584 = vpop.f32.mrf.mxu0
        %v585 = vadd.f32 0.0, %v584
        %586 = vdwg.mxu0
        %587 = vset.pattern.permute.xlu0 2
        %588 = vperm.xlu0 %587, %v146
        %v589 = vpop.permute.xlu0 %588
        %590 = vset.pattern.permute.xlu0 2
        %591 = vperm.xlu0 %590, %v147
        %v592 = vpop.permute.xlu0 %591
        %593 = vset.pattern.permute.xlu0 2
        %594 = vperm.xlu0 %593, %v148
        %v595 = vpop.permute.xlu0 %594
        %596 = vset.pattern.permute.xlu0 2
        %597 = vperm.xlu0 %596, %v149
        %v598 = vpop.permute.xlu0 %597
        %599 = vset.pattern.permute.xlu0 2
        %600 = vperm.xlu0 %599, %v150
        %v601 = vpop.permute.xlu0 %600
        %602 = vset.pattern.permute.xlu0 2
        %603 = vperm.xlu0 %602, %v151
        %v604 = vpop.permute.xlu0 %603
        %605 = vset.pattern.permute.xlu0 2
        %606 = vperm.xlu0 %605, %v152
        %v607 = vpop.permute.xlu0 %606
        %608 = vset.pattern.permute.xlu0 2
        %609 = vperm.xlu0 %608, %v153
        %v610 = vpop.permute.xlu0 %609
        %611 = vset.pattern.permute.xlu0 2
        %612 = vperm.xlu0 %611, %v154
        %v613 = vpop.permute.xlu0 %612
        %614 = vset.pattern.permute.xlu0 2
        %615 = vperm.xlu0 %614, %v155
        %v616 = vpop.permute.xlu0 %615
        %617 = vset.pattern.permute.xlu0 2
        %618 = vperm.xlu0 %617, %v156
        %v619 = vpop.permute.xlu0 %618
        %620 = vset.pattern.permute.xlu0 2
        %621 = vperm.xlu0 %620, %v157
        %v622 = vpop.permute.xlu0 %621
        %623 = vset.pattern.permute.xlu0 2
        %624 = vperm.xlu0 %623, %v158
        %v625 = vpop.permute.xlu0 %624
        %626 = vset.pattern.permute.xlu0 2
        %627 = vperm.xlu0 %626, %v159
        %v628 = vpop.permute.xlu0 %627
        %629 = vset.pattern.permute.xlu0 2
        %630 = vperm.xlu0 %629, %v160
        %v631 = vpop.permute.xlu0 %630
        %632 = vset.pattern.permute.xlu0 2
        %633 = vperm.xlu0 %632, %v161
        %v634 = vpop.permute.xlu0 %633
        %vm635 = vcmp.eq.s32.totalorder %v163, %v589
        %vm636 = vcmp.eq.s32.totalorder %v163, %v592
        %vm637 = vcmp.eq.s32.totalorder %v163, %v595
        %vm638 = vcmp.eq.s32.totalorder %v163, %v598
        %vm639 = vcmp.eq.s32.totalorder %v163, %v601
        %vm640 = vcmp.eq.s32.totalorder %v163, %v604
        %vm641 = vcmp.eq.s32.totalorder %v163, %v607
        %vm642 = vcmp.eq.s32.totalorder %v163, %v610
        %vm643 = vcmp.eq.s32.totalorder %v163, %v613
        %vm644 = vcmp.eq.s32.totalorder %v163, %v616
        %vm645 = vcmp.eq.s32.totalorder %v163, %v619
        %vm646 = vcmp.eq.s32.totalorder %v163, %v622
        %vm647 = vcmp.eq.s32.totalorder %v163, %v625
        %vm648 = vcmp.eq.s32.totalorder %v163, %v628
        %vm649 = vcmp.eq.s32.totalorder %v163, %v631
        %vm650 = vcmp.eq.s32.totalorder %v163, %v634
        %v651 = vsel %vm635, 1, 0
        %v652 = vsel %vm636, 1, 0
        %v653 = vsel %vm637, 1, 0
        %v654 = vsel %vm638, 1, 0
        %v655 = vsel %vm639, 1, 0
        %v656 = vsel %vm640, 1, 0
        %v657 = vsel %vm641, 1, 0
        %v658 = vsel %vm642, 1, 0
        %v659 = vsel %vm643, 1, 0
        %v660 = vsel %vm644, 1, 0
        %v661 = vsel %vm645, 1, 0
        %v662 = vsel %vm646, 1, 0
        %v663 = vsel %vm647, 1, 0
        %v664 = vsel %vm648, 1, 0
        %v665 = vsel %vm649, 1, 0
        %v666 = vsel %vm650, 1, 0
        %v667 = vcvt.s32.f32 %v651
        %v668 = vcvt.s32.f32 %v652
        %v669 = vcvt.s32.f32 %v653
        %v670 = vcvt.s32.f32 %v654
        %v671 = vcvt.s32.f32 %v655
        %v672 = vcvt.s32.f32 %v656
        %v673 = vcvt.s32.f32 %v657
        %v674 = vcvt.s32.f32 %v658
        %v675 = vcvt.s32.f32 %v659
        %v676 = vcvt.s32.f32 %v660
        %v677 = vcvt.s32.f32 %v661
        %v678 = vcvt.s32.f32 %v662
        %v679 = vcvt.s32.f32 %v663
        %v680 = vcvt.s32.f32 %v664
        %v681 = vcvt.s32.f32 %v665
        %v682 = vcvt.s32.f32 %v666
        %v684 = vsel %vm260, %v667, 0
        %v687 = vsel %vm260, %v668, 0
        %v690 = vsel %vm260, %v669, 0
        %v693 = vsel %vm260, %v670, 0
        %v696 = vsel %vm260, %v671, 0
        %v699 = vsel %vm260, %v672, 0
        %v702 = vsel %vm260, %v673, 0
        %v705 = vsel %vm260, %v674, 0
        %v708 = vsel %vm260, %v675, 0
        %v711 = vsel %vm260, %v676, 0
        %v714 = vsel %vm260, %v677, 0
        %v717 = vsel %vm260, %v678, 0
        %v720 = vsel %vm260, %v679, 0
        %v723 = vsel %vm260, %v680, 0
        %v726 = vsel %vm260, %v681, 0
        %v729 = vsel %vm260, %v682, 0
        %731 = vmatpush.msra.mxu0 0.0
        %732 = vmatpush.msra.mxu0 0.0
        %733 = vmatpush.msra.mxu0 0.0
        %734 = vmatpush.msra.mxu0 0.0
        %735 = vmatpush.msra.mxu0 0.0
        %736 = vmatpush.msra.mxu0 0.0
        %737 = vmatpush.msra.mxu0 0.0
        %738 = vmatpush.msra.mxu0 0.0
        %739 = vmatpush.msra.mxu0 0.0
        %740 = vmatpush.msra.mxu0 0.0
        %741 = vmatpush.msra.mxu0 0.0
        %742 = vmatpush.msra.mxu0 0.0
        %743 = vmatpush.msra.mxu0 0.0
        %744 = vmatpush.msra.mxu0 0.0
        %745 = vmatpush.msra.mxu0 0.0
        %746 = vmatpush.msra.mxu0 %v311
        %747 = vmatmul.f32.gmra.mxu0 %v684
        %v748 = vpop.f32.mrf.mxu0
        %v749 = vadd.f32 0.0, %v748
        %750 = vmatmul.f32.gmra.mxu0 %v687
        %v751 = vpop.f32.mrf.mxu0
        %v752 = vadd.f32 0.0, %v751
        %753 = vmatmul.f32.gmra.mxu0 %v690
        %v754 = vpop.f32.mrf.mxu0
        %v755 = vadd.f32 0.0, %v754
        %756 = vmatmul.f32.gmra.mxu0 %v693
        %v757 = vpop.f32.mrf.mxu0
        %v758 = vadd.f32 0.0, %v757
        %759 = vmatmul.f32.gmra.mxu0 %v696
        %v760 = vpop.f32.mrf.mxu0
        %v761 = vadd.f32 0.0, %v760
        %762 = vmatmul.f32.gmra.mxu0 %v699
        %v763 = vpop.f32.mrf.mxu0
        %v764 = vadd.f32 0.0, %v763
        %765 = vmatmul.f32.gmra.mxu0 %v702
        %v766 = vpop.f32.mrf.mxu0
        %v767 = vadd.f32 0.0, %v766
        %768 = vmatmul.f32.gmra.mxu0 %v705
        %v769 = vpop.f32.mrf.mxu0
        %v770 = vadd.f32 0.0, %v769
        %771 = vmatmul.f32.gmra.mxu0 %v708
        %v772 = vpop.f32.mrf.mxu0
        %v773 = vadd.f32 0.0, %v772
        %774 = vmatmul.f32.gmra.mxu0 %v711
        %v775 = vpop.f32.mrf.mxu0
        %v776 = vadd.f32 0.0, %v775
        %777 = vmatmul.f32.gmra.mxu0 %v714
        %v778 = vpop.f32.mrf.mxu0
        %v779 = vadd.f32 0.0, %v778
        %780 = vmatmul.f32.gmra.mxu0 %v717
        %v781 = vpop.f32.mrf.mxu0
        %v782 = vadd.f32 0.0, %v781
        %783 = vmatmul.f32.gmra.mxu0 %v720
        %v784 = vpop.f32.mrf.mxu0
        %v785 = vadd.f32 0.0, %v784
        %786 = vmatmul.f32.gmra.mxu0 %v723
        %v787 = vpop.f32.mrf.mxu0
        %v788 = vadd.f32 0.0, %v787
        %789 = vmatmul.f32.gmra.mxu0 %v726
        %v790 = vpop.f32.mrf.mxu0
        %v791 = vadd.f32 0.0, %v790
        %792 = vmatmul.f32.gmra.mxu0 %v729
        %v793 = vpop.f32.mrf.mxu0
        %v794 = vadd.f32 0.0, %v793
        %795 = vdwg.mxu0
        %796 = vset.pattern.permute.xlu0 3
        %797 = vperm.xlu0 %796, %v146
        %v798 = vpop.permute.xlu0 %797
        %799 = vset.pattern.permute.xlu0 3
        %800 = vperm.xlu0 %799, %v147
        %v801 = vpop.permute.xlu0 %800
        %802 = vset.pattern.permute.xlu0 3
        %803 = vperm.xlu0 %802, %v148
        %v804 = vpop.permute.xlu0 %803
        %805 = vset.pattern.permute.xlu0 3
        %806 = vperm.xlu0 %805, %v149
        %v807 = vpop.permute.xlu0 %806
        %808 = vset.pattern.permute.xlu0 3
        %809 = vperm.xlu0 %808, %v150
        %v810 = vpop.permute.xlu0 %809
        %811 = vset.pattern.permute.xlu0 3
        %812 = vperm.xlu0 %811, %v151
        %v813 = vpop.permute.xlu0 %812
        %814 = vset.pattern.permute.xlu0 3
        %815 = vperm.xlu0 %814, %v152
        %v816 = vpop.permute.xlu0 %815
        %817 = vset.pattern.permute.xlu0 3
        %818 = vperm.xlu0 %817, %v153
        %v819 = vpop.permute.xlu0 %818
        %820 = vset.pattern.permute.xlu0 3
        %821 = vperm.xlu0 %820, %v154
        %v822 = vpop.permute.xlu0 %821
        %823 = vset.pattern.permute.xlu0 3
        %824 = vperm.xlu0 %823, %v155
        %v825 = vpop.permute.xlu0 %824
        %826 = vset.pattern.permute.xlu0 3
        %827 = vperm.xlu0 %826, %v156
        %v828 = vpop.permute.xlu0 %827
        %829 = vset.pattern.permute.xlu0 3
        %830 = vperm.xlu0 %829, %v157
        %v831 = vpop.permute.xlu0 %830
        %832 = vset.pattern.permute.xlu0 3
        %833 = vperm.xlu0 %832, %v158
        %v834 = vpop.permute.xlu0 %833
        %835 = vset.pattern.permute.xlu0 3
        %836 = vperm.xlu0 %835, %v159
        %v837 = vpop.permute.xlu0 %836
        %838 = vset.pattern.permute.xlu0 3
        %839 = vperm.xlu0 %838, %v160
        %v840 = vpop.permute.xlu0 %839
        %841 = vset.pattern.permute.xlu0 3
        %842 = vperm.xlu0 %841, %v161
        %v843 = vpop.permute.xlu0 %842
        %vm844 = vcmp.eq.s32.totalorder %v163, %v798
        %vm845 = vcmp.eq.s32.totalorder %v163, %v801
        %vm846 = vcmp.eq.s32.totalorder %v163, %v804
        %vm847 = vcmp.eq.s32.totalorder %v163, %v807
        %vm848 = vcmp.eq.s32.totalorder %v163, %v810
        %vm849 = vcmp.eq.s32.totalorder %v163, %v813
        %vm850 = vcmp.eq.s32.totalorder %v163, %v816
        %vm851 = vcmp.eq.s32.totalorder %v163, %v819
        %vm852 = vcmp.eq.s32.totalorder %v163, %v822
        %vm853 = vcmp.eq.s32.totalorder %v163, %v825
        %vm854 = vcmp.eq.s32.totalorder %v163, %v828
        %vm855 = vcmp.eq.s32.totalorder %v163, %v831
        %vm856 = vcmp.eq.s32.totalorder %v163, %v834
        %vm857 = vcmp.eq.s32.totalorder %v163, %v837
        %vm858 = vcmp.eq.s32.totalorder %v163, %v840
        %vm859 = vcmp.eq.s32.totalorder %v163, %v843
        %v860 = vsel %vm844, 1, 0
        %v861 = vsel %vm845, 1, 0
        %v862 = vsel %vm846, 1, 0
        %v863 = vsel %vm847, 1, 0
        %v864 = vsel %vm848, 1, 0
        %v865 = vsel %vm849, 1, 0
        %v866 = vsel %vm850, 1, 0
        %v867 = vsel %vm851, 1, 0
        %v868 = vsel %vm852, 1, 0
        %v869 = vsel %vm853, 1, 0
        %v870 = vsel %vm854, 1, 0
        %v871 = vsel %vm855, 1, 0
        %v872 = vsel %vm856, 1, 0
        %v873 = vsel %vm857, 1, 0
        %v874 = vsel %vm858, 1, 0
        %v875 = vsel %vm859, 1, 0
        %v876 = vcvt.s32.f32 %v860
        %v877 = vcvt.s32.f32 %v861
        %v878 = vcvt.s32.f32 %v862
        %v879 = vcvt.s32.f32 %v863
        %v880 = vcvt.s32.f32 %v864
        %v881 = vcvt.s32.f32 %v865
        %v882 = vcvt.s32.f32 %v866
        %v883 = vcvt.s32.f32 %v867
        %v884 = vcvt.s32.f32 %v868
        %v885 = vcvt.s32.f32 %v869
        %v886 = vcvt.s32.f32 %v870
        %v887 = vcvt.s32.f32 %v871
        %v888 = vcvt.s32.f32 %v872
        %v889 = vcvt.s32.f32 %v873
        %v890 = vcvt.s32.f32 %v874
        %v891 = vcvt.s32.f32 %v875
        %v893 = vsel %vm260, %v876, 0
        %v896 = vsel %vm260, %v877, 0
        %v899 = vsel %vm260, %v878, 0
        %v902 = vsel %vm260, %v879, 0
        %v905 = vsel %vm260, %v880, 0
        %v908 = vsel %vm260, %v881, 0
        %v911 = vsel %vm260, %v882, 0
        %v914 = vsel %vm260, %v883, 0
        %v917 = vsel %vm260, %v884, 0
        %v920 = vsel %vm260, %v885, 0
        %v923 = vsel %vm260, %v886, 0
        %v926 = vsel %vm260, %v887, 0
        %v929 = vsel %vm260, %v888, 0
        %v932 = vsel %vm260, %v889, 0
        %v935 = vsel %vm260, %v890, 0
        %v938 = vsel %vm260, %v891, 0
        %940 = vmatpush.msra.mxu0 0.0
        %941 = vmatpush.msra.mxu0 0.0
        %942 = vmatpush.msra.mxu0 0.0
        %943 = vmatpush.msra.mxu0 0.0
        %944 = vmatpush.msra.mxu0 0.0
        %945 = vmatpush.msra.mxu0 0.0
        %946 = vmatpush.msra.mxu0 0.0
        %947 = vmatpush.msra.mxu0 0.0
        %948 = vmatpush.msra.mxu0 0.0
        %949 = vmatpush.msra.mxu0 0.0
        %950 = vmatpush.msra.mxu0 0.0
        %951 = vmatpush.msra.mxu0 0.0
        %952 = vmatpush.msra.mxu0 0.0
        %953 = vmatpush.msra.mxu0 0.0
        %954 = vmatpush.msra.mxu0 0.0
        %955 = vmatpush.msra.mxu0 %v311
        %956 = vmatmul.f32.gmra.mxu0 %v893
        %v957 = vpop.f32.mrf.mxu0
        %v958 = vadd.f32 0.0, %v957
        %959 = vmatmul.f32.gmra.mxu0 %v896
        %v960 = vpop.f32.mrf.mxu0
        %v961 = vadd.f32 0.0, %v960
        %962 = vmatmul.f32.gmra.mxu0 %v899
        %v963 = vpop.f32.mrf.mxu0
        %v964 = vadd.f32 0.0, %v963
        %965 = vmatmul.f32.gmra.mxu0 %v902
        %v966 = vpop.f32.mrf.mxu0
        %v967 = vadd.f32 0.0, %v966
        %968 = vmatmul.f32.gmra.mxu0 %v905
        %v969 = vpop.f32.mrf.mxu0
        %v970 = vadd.f32 0.0, %v969
        %971 = vmatmul.f32.gmra.mxu0 %v908
        %v972 = vpop.f32.mrf.mxu0
        %v973 = vadd.f32 0.0, %v972
        %974 = vmatmul.f32.gmra.mxu0 %v911
        %v975 = vpop.f32.mrf.mxu0
        %v976 = vadd.f32 0.0, %v975
        %977 = vmatmul.f32.gmra.mxu0 %v914
        %v978 = vpop.f32.mrf.mxu0
        %v979 = vadd.f32 0.0, %v978
        %980 = vmatmul.f32.gmra.mxu0 %v917
        %v981 = vpop.f32.mrf.mxu0
        %v982 = vadd.f32 0.0, %v981
        %983 = vmatmul.f32.gmra.mxu0 %v920
        %v984 = vpop.f32.mrf.mxu0
        %v985 = vadd.f32 0.0, %v984
        %986 = vmatmul.f32.gmra.mxu0 %v923
        %v987 = vpop.f32.mrf.mxu0
        %v988 = vadd.f32 0.0, %v987
        %989 = vmatmul.f32.gmra.mxu0 %v926
        %v990 = vpop.f32.mrf.mxu0
        %v991 = vadd.f32 0.0, %v990
        %992 = vmatmul.f32.gmra.mxu0 %v929
        %v993 = vpop.f32.mrf.mxu0
        %v994 = vadd.f32 0.0, %v993
        %995 = vmatmul.f32.gmra.mxu0 %v932
        %v996 = vpop.f32.mrf.mxu0
        %v997 = vadd.f32 0.0, %v996
        %998 = vmatmul.f32.gmra.mxu0 %v935
        %v999 = vpop.f32.mrf.mxu0
        %v1000 = vadd.f32 0.0, %v999
        %1001 = vmatmul.f32.gmra.mxu0 %v938
        %v1002 = vpop.f32.mrf.mxu0
        %v1003 = vadd.f32 0.0, %v1002
        %1004 = vdwg.mxu0
        %1021 = vrot.lane.b32.xlu0 %v540, 32
        %v1022 = vpop.permute.xlu0 %1021
        %1023 = vrot.lane.b32.xlu0 %v543, 32
        %v1024 = vpop.permute.xlu0 %1023
        %1025 = vrot.lane.b32.xlu0 %v546, 32
        %v1026 = vpop.permute.xlu0 %1025
        %1027 = vrot.lane.b32.xlu0 %v549, 32
        %v1028 = vpop.permute.xlu0 %1027
        %1029 = vrot.lane.b32.xlu0 %v552, 32
        %v1030 = vpop.permute.xlu0 %1029
        %1031 = vrot.lane.b32.xlu0 %v555, 32
        %v1032 = vpop.permute.xlu0 %1031
        %1033 = vrot.lane.b32.xlu0 %v558, 32
        %v1034 = vpop.permute.xlu0 %1033
        %1035 = vrot.lane.b32.xlu0 %v561, 32
        %v1036 = vpop.permute.xlu0 %1035
        %1037 = vrot.lane.b32.xlu0 %v564, 32
        %v1038 = vpop.permute.xlu0 %1037
        %1039 = vrot.lane.b32.xlu0 %v567, 32
        %v1040 = vpop.permute.xlu0 %1039
        %1041 = vrot.lane.b32.xlu0 %v570, 32
        %v1042 = vpop.permute.xlu0 %1041
        %1043 = vrot.lane.b32.xlu0 %v573, 32
        %v1044 = vpop.permute.xlu0 %1043
        %1045 = vrot.lane.b32.xlu0 %v576, 32
        %v1046 = vpop.permute.xlu0 %1045
        %1047 = vrot.lane.b32.xlu0 %v579, 32
        %v1048 = vpop.permute.xlu0 %1047
        %1049 = vrot.lane.b32.xlu0 %v582, 32
        %v1050 = vpop.permute.xlu0 %1049
        %1051 = vrot.lane.b32.xlu0 %v585, 32
        %v1052 = vpop.permute.xlu0 %1051
        %1085 = vrot.lane.b32.xlu0 %v749, 64
        %v1086 = vpop.permute.xlu0 %1085
        %1087 = vrot.lane.b32.xlu0 %v752, 64
        %v1088 = vpop.permute.xlu0 %1087
        %1089 = vrot.lane.b32.xlu0 %v755, 64
        %v1090 = vpop.permute.xlu0 %1089
        %1091 = vrot.lane.b32.xlu0 %v758, 64
        %v1092 = vpop.permute.xlu0 %1091
        %1093 = vrot.lane.b32.xlu0 %v761, 64
        %v1094 = vpop.permute.xlu0 %1093
        %1095 = vrot.lane.b32.xlu0 %v764, 64
        %v1096 = vpop.permute.xlu0 %1095
        %1097 = vrot.lane.b32.xlu0 %v767, 64
        %v1098 = vpop.permute.xlu0 %1097
        %1099 = vrot.lane.b32.xlu0 %v770, 64
        %v1100 = vpop.permute.xlu0 %1099
        %1101 = vrot.lane.b32.xlu0 %v773, 64
        %v1102 = vpop.permute.xlu0 %1101
        %1103 = vrot.lane.b32.xlu0 %v776, 64
        %v1104 = vpop.permute.xlu0 %1103
        %1105 = vrot.lane.b32.xlu0 %v779, 64
        %v1106 = vpop.permute.xlu0 %1105
        %1107 = vrot.lane.b32.xlu0 %v782, 64
        %v1108 = vpop.permute.xlu0 %1107
        %1109 = vrot.lane.b32.xlu0 %v785, 64
        %v1110 = vpop.permute.xlu0 %1109
        %1111 = vrot.lane.b32.xlu0 %v788, 64
        %v1112 = vpop.permute.xlu0 %1111
        %1113 = vrot.lane.b32.xlu0 %v791, 64
        %v1114 = vpop.permute.xlu0 %1113
        %1115 = vrot.lane.b32.xlu0 %v794, 64
        %v1116 = vpop.permute.xlu0 %1115
        %1149 = vrot.lane.b32.xlu0 %v958, 96
        %v1150 = vpop.permute.xlu0 %1149
        %1151 = vrot.lane.b32.xlu0 %v961, 96
        %v1152 = vpop.permute.xlu0 %1151
        %1153 = vrot.lane.b32.xlu0 %v964, 96
        %v1154 = vpop.permute.xlu0 %1153
        %1155 = vrot.lane.b32.xlu0 %v967, 96
        %v1156 = vpop.permute.xlu0 %1155
        %1157 = vrot.lane.b32.xlu0 %v970, 96
        %v1158 = vpop.permute.xlu0 %1157
        %1159 = vrot.lane.b32.xlu0 %v973, 96
        %v1160 = vpop.permute.xlu0 %1159
        %1161 = vrot.lane.b32.xlu0 %v976, 96
        %v1162 = vpop.permute.xlu0 %1161
        %1163 = vrot.lane.b32.xlu0 %v979, 96
        %v1164 = vpop.permute.xlu0 %1163
        %1165 = vrot.lane.b32.xlu0 %v982, 96
        %v1166 = vpop.permute.xlu0 %1165
        %1167 = vrot.lane.b32.xlu0 %v985, 96
        %v1168 = vpop.permute.xlu0 %1167
        %1169 = vrot.lane.b32.xlu0 %v988, 96
        %v1170 = vpop.permute.xlu0 %1169
        %1171 = vrot.lane.b32.xlu0 %v991, 96
        %v1172 = vpop.permute.xlu0 %1171
        %1173 = vrot.lane.b32.xlu0 %v994, 96
        %v1174 = vpop.permute.xlu0 %1173
        %1175 = vrot.lane.b32.xlu0 %v997, 96
        %v1176 = vpop.permute.xlu0 %1175
        %1177 = vrot.lane.b32.xlu0 %v1000, 96
        %v1178 = vpop.permute.xlu0 %1177
        %1179 = vrot.lane.b32.xlu0 %v1003, 96
        %v1180 = vpop.permute.xlu0 %1179
        %vm1197 = vcmask 261120
        %v1198 = vsel %vm1197, %v331, %v1022
        %v1199 = vsel %vm1197, %v334, %v1024
        %v1200 = vsel %vm1197, %v337, %v1026
        %v1201 = vsel %vm1197, %v340, %v1028
        %v1202 = vsel %vm1197, %v343, %v1030
        %v1203 = vsel %vm1197, %v346, %v1032
        %v1204 = vsel %vm1197, %v349, %v1034
        %v1205 = vsel %vm1197, %v352, %v1036
        %v1206 = vsel %vm1197, %v355, %v1038
        %v1207 = vsel %vm1197, %v358, %v1040
        %v1208 = vsel %vm1197, %v361, %v1042
        %v1209 = vsel %vm1197, %v364, %v1044
        %v1210 = vsel %vm1197, %v367, %v1046
        %v1211 = vsel %vm1197, %v370, %v1048
        %v1212 = vsel %vm1197, %v373, %v1050
        %v1213 = vsel %vm1197, %v376, %v1052
        %vm1214 = vcmask 523264
        %v1215 = vsel %vm1214, %v1198, %v1086
        %v1216 = vsel %vm1214, %v1199, %v1088
        %v1217 = vsel %vm1214, %v1200, %v1090
        %v1218 = vsel %vm1214, %v1201, %v1092
        %v1219 = vsel %vm1214, %v1202, %v1094
        %v1220 = vsel %vm1214, %v1203, %v1096
        %v1221 = vsel %vm1214, %v1204, %v1098
        %v1222 = vsel %vm1214, %v1205, %v1100
        %v1223 = vsel %vm1214, %v1206, %v1102
        %v1224 = vsel %vm1214, %v1207, %v1104
        %v1225 = vsel %vm1214, %v1208, %v1106
        %v1226 = vsel %vm1214, %v1209, %v1108
        %v1227 = vsel %vm1214, %v1210, %v1110
        %v1228 = vsel %vm1214, %v1211, %v1112
        %v1229 = vsel %vm1214, %v1212, %v1114
        %v1230 = vsel %vm1214, %v1213, %v1116
        %vm1231 = vcmask 785408
        %v1232 = vsel %vm1231, %v1215, %v1150
        %v1233 = vsel %vm1231, %v1216, %v1152
        %v1234 = vsel %vm1231, %v1217, %v1154
        %v1235 = vsel %vm1231, %v1218, %v1156
        %v1236 = vsel %vm1231, %v1219, %v1158
        %v1237 = vsel %vm1231, %v1220, %v1160
        %v1238 = vsel %vm1231, %v1221, %v1162
        %v1239 = vsel %vm1231, %v1222, %v1164
        %v1240 = vsel %vm1231, %v1223, %v1166
        %v1241 = vsel %vm1231, %v1224, %v1168
        %v1242 = vsel %vm1231, %v1225, %v1170
        %v1243 = vsel %vm1231, %v1226, %v1172
        %v1244 = vsel %vm1231, %v1227, %v1174
        %v1245 = vsel %vm1231, %v1228, %v1176
        %v1246 = vsel %vm1231, %v1229, %v1178
        %v1247 = vsel %vm1231, %v1230, %v1180
        %1248 = vst [vmem:[%s137] sm:$0xff] %v1232
        %1249 = vst [vmem:[%s137 + $0x8] sm:$0xff] %v1233
        %1250 = vst [vmem:[%s137 + $0x10] sm:$0xff] %v1234
        %1251 = vst [vmem:[%s137 + $0x18] sm:$0xff] %v1235
        %1252 = vst [vmem:[%s137 + $0x20] sm:$0xff] %v1236
        %1253 = vst [vmem:[%s137 + $0x28] sm:$0xff] %v1237
        %1254 = vst [vmem:[%s137 + $0x30] sm:$0xff] %v1238
        %1255 = vst [vmem:[%s137 + $0x38] sm:$0xff] %v1239
        %1256 = vst [vmem:[%s137 + $0x40] sm:$0xff] %v1240
        %1257 = vst [vmem:[%s137 + $0x48] sm:$0xff] %v1241
        %1258 = vst [vmem:[%s137 + $0x50] sm:$0xff] %v1242
        %1259 = vst [vmem:[%s137 + $0x58] sm:$0xff] %v1243
        %1260 = vst [vmem:[%s137 + $0x60] sm:$0xff] %v1244
        %1261 = vst [vmem:[%s137 + $0x68] sm:$0xff] %v1245
        %1262 = vst [vmem:[%s137 + $0x70] sm:$0xff] %v1246
        %1263 = vst [vmem:[%s137 + $0x78] sm:$0xff] %v1247
        %s1264 = sand.u32 %s71, 1
        %s1265 = scalar_lea.sflag [#allocation3], %s1264
        %s1266 = sand.u32 %s71, 1
        %s1267 = smul.addr %s1266, 128
        %s1268 = scalar_lea.vmem [#allocation2], %s1267
        // Predicated region
        $region29: #{tpu_custom_call.1} parent=27 // pred_check
          %p1269 = pneg %p81
        $region30: #{tpu_custom_call.1} parent=27 // pred_check_branch
          %1271 = sbr.rel (%p1269) target = $region32
        $region31: #{tpu_custom_call.1} parent=27 // pred_region
          %s1272 = smul.u32 16, %s16
          %1274 = vsyncadd %s1265, 0
          %s1275 = smul.addr %s1272, 8
          %s1276 = scalar_lea.hbm %s2, %s1275
          %s1277 = sshll.u32 %s1268, 4
          %s1278 = int_to_ptr.vmem [resolvable:$true] %s1277
          %s1279 = sshll.u32 %s1276, 4
          %s1280 = int_to_ptr.hbm [resolvable:$true] %s1279
          %1285 = dma.vmem_to_hbm [thread:$0]  %s1278, 2048, %s1280, %s1265, 128, 128, 8
        $region32: #{tpu_custom_call.1} parent=27 // pred_fallthru
          _
      $region28: #{tpu_custom_call.1} parent=5 // pred_fallthru
        _
      %p1286 = scmp.le.s32.totalorder 2, %s11
      // Predicated region
      $region33: #{tpu_custom_call.1} parent=5 // pred_check
        %p1287 = pneg %p1286
      $region34: #{tpu_custom_call.1} parent=5 // pred_check_branch
        %1289 = sbr.rel (%p1287) target = $region36
      $region35: #{tpu_custom_call.1} parent=5 // pred_region
        %s1290 = ssub.s32 %s11, 2
        // Predicated region
        $region37: #{tpu_custom_call.1} parent=35 // pred_check
          %p1291 = pneg %p87
        $region38: #{tpu_custom_call.1} parent=35 // pred_check_branch
          %1293 = sbr.rel (%p1291) target = $region40
        $region39: #{tpu_custom_call.1} parent=35 // pred_region
          %s1294 = sand.u32 %s72, 1
          %s1295 = scalar_lea.sflag [#allocation3], %s1294
          %s1296 = sand.u32 %s72, 1
          %s1297 = smul.addr %s1296, 128
          %s1298 = scalar_lea.vmem [#allocation2], %s1297
          %1300 = dma.done %s1295, 2048
        $region40: #{tpu_custom_call.1} parent=35 // pred_fallthru
          _
      $region36: #{tpu_custom_call.1} parent=5 // pred_fallthru
        _
    $region6: #{tpu_custom_call.1} parent=1 // loop_footer
      %s15 = sadd.s32 1, %s11
    $region7: #{tpu_custom_call.1} parent=1 // loop_footer_branch
      %10 = sbr.rel target = $region3
    $region8: #{tpu_custom_call.1} parent=1 // loop_exit
      _
    %1301 = vsyncpa [#allocation3], 1
    %s1302 = scalar_lea.sflag [#allocation3], 1
    %1303 = vsyncpa %s1302, 1

</llo_original>
